<compile_context>
chip_gen: v7x
topology: tpu7x:2x2x1
jax: 0.10.0
libtpu: 0.0.40
codegen_flags: <defaults>
</compile_context>

<pallas_src>
import jax
import jax.numpy as jnp
from jax.experimental import pallas as pl
from jax.experimental.pallas import tpu as pltpu


def clip_embedding_kernel(tok_ref, table_hbm, pos_ref, out_ref, rows, sems):
    # tok_ref:   (B, T) int32, SMEM (scalar prefetch) -- addressing only
    # table_hbm: (V, E) f32, HBM (pl.ANY) -- gathered row-by-row via DMA
    # pos_ref:   (T, E) f32, VMEM
    # out_ref:   (1, T, E) f32, VMEM block of the (B, T, E) output
    # rows:      (T, E) f32 VMEM scratch (gathered embedding rows)
    # sems:      (T,) DMA semaphores
    b = pl.program_id(0)
    T, E = rows.shape

    # Issue all row-gather DMAs for this sequence, then wait for all of them.
    copies = []
    for t in range(T):  # T is small & static; unrolled at trace time
        tok = tok_ref[b, t]
        cp = pltpu.make_async_copy(
            table_hbm.at[pl.ds(tok, 1), :],   # (1, E) row in HBM
            rows.at[pl.ds(t, 1), :],          # (1, E) slot in VMEM
            sems.at[t],
        )
        cp.start()
        copies.append(cp)
    for cp in copies:
        cp.wait()

    # Fused position-embedding add, single vectorized store.
    out_ref[...] = (rows[...] + pos_ref[...])[None, :, :].astype(out_ref.dtype)


def clip_embedding(tokens, token_table, pos_emb):
    """Pallas forward of CLIPEmbedding.

    tokens:      (B, T) int
    token_table: (n_vocab, n_embd) float32  (nn.Embedding weight)
    pos_emb:     (n_token, n_embd) float32  (T must equal n_token)
    returns:     (B, T, n_embd) float32
    """
    B, T = tokens.shape
    V, E = token_table.shape
    assert pos_emb.shape == (T, E)

    # Clamp IDs so a bad token can never drive an out-of-bounds HBM DMA.
    # (nn.Embedding would raise instead; clamping is the safe TPU-side choice.)
    tokens = jnp.clip(tokens.astype(jnp.int32), 0, V - 1)

    grid_spec = pltpu.PrefetchScalarGridSpec(
        num_scalar_prefetch=1,           # tokens -> SMEM, visible to index_maps
        grid=(B,),                       # one sequence per grid step
        in_specs=[
            pl.BlockSpec(memory_space=pl.ANY),               # table stays in HBM
            pl.BlockSpec((T, E), lambda b, tok: (0, 0)),     # position embedding
        ],
        out_specs=pl.BlockSpec((1, T, E), lambda b, tok: (b, 0, 0)),
        scratch_shapes=[
            pltpu.VMEM((T, E), token_table.dtype),           # gathered rows
            pltpu.SemaphoreType.DMA((T,)),                   # one sem per row DMA
        ],
    )

    return pl.pallas_call(
        clip_embedding_kernel,
        out_shape=jax.ShapeDtypeStruct((B, T, E), token_table.dtype),
        grid_spec=grid_spec,
        compiler_params=pltpu.CompilerParams(
            dimension_semantics=("parallel",),   # shard batch across TCs on v7x
        ),
    )(tokens, token_table, pos_emb)


if __name__ == "__main__":
    # Small shapes consistent with the module: n_vocab=64, n_embd=32, n_token=8, batch=2.
    n_vocab, n_embd, n_token, batch = 64, 32, 8, 2

    key = jax.random.PRNGKey(0)
    k_tok, k_tab, k_pos = jax.random.split(key, 3)

    tokens = jax.random.randint(k_tok, (batch, n_token), 0, n_vocab, dtype=jnp.int32)
    # nn.Embedding weight ~ N(0, 1); position_embedding is zeros in __init__,
    # but use a small random tensor so the add path is actually exercised.
    token_table = jax.random.normal(k_tab, (n_vocab, n_embd), dtype=jnp.float32)
    pos_emb = 0.02 * jax.random.normal(k_pos, (n_token, n_embd), dtype=jnp.float32)

    out = clip_embedding(tokens, token_table, pos_emb)
    out = jax.block_until_ready(out)

    # Pure-JAX reference check.
    ref = jnp.take(token_table, tokens, axis=0) + pos_emb[None, :, :]
    assert out.shape == (batch, n_token, n_embd)
    assert jnp.allclose(out, ref, atol=1e-5, rtol=1e-5)

    print("KERNEL_OK")
</pallas_src>

<mosaic_0001>
module attributes {stable_mosaic.version = 11 : i64} {
  func.func @clip_embedding_kernel(%arg0: i32, %arg1: memref<2x8xi32, #tpu.memory_space<smem>>, %arg2: memref<64x32xf32, #tpu.memory_space<any>>, %arg3: memref<8x32xf32, #tpu.memory_space<vmem>>, %arg4: memref<1x8x32xf32, #tpu.memory_space<vmem>>, %arg5: memref<8x32xf32, #tpu.memory_space<vmem>>, %arg6: memref<8x!tpu.dma_semaphore, #tpu.memory_space<semaphore_mem>>) attributes {dimension_semantics = [#tpu.dimension_semantics<parallel>], iteration_bounds = array<i64: 2>, scalar_prefetch = 1 : i64, scratch_operands = 2 : i64, tpu.core_type = #tpu.core_type<tc>, window_params = [{}, {pipeline_mode = #tpu.pipeline_mode<synchronous>, transform_indices = @transform_1, window_bounds = array<i64: 8, 32>}, {transform_indices = @transform_2, window_bounds = array<i64: 1, 8, 32>}]} {
    %0 = arith.index_cast %arg0 : i32 to index
    %c0 = arith.constant 0 : index
    %1 = memref.load %arg1[%0, %c0] : memref<2x8xi32, #tpu.memory_space<smem>>
    %c0_i32 = arith.constant 0 : i32
    %c0_i32_0 = arith.constant 0 : i32
    %2 = tpu.memref_slice %arg2[%1, %c0_i32_0] : memref<64x32xf32, #tpu.memory_space<any>> -> memref<1x32xf32, #tpu.memory_space<any>>
    %c0_i32_1 = arith.constant 0 : i32
    %c0_i32_2 = arith.constant 0 : i32
    %3 = tpu.memref_slice %arg5[%c0_i32_1, %c0_i32_2] : memref<8x32xf32, #tpu.memory_space<vmem>> -> memref<1x32xf32, #tpu.memory_space<vmem>>
    %4 = tpu.memref_slice %arg6[%c0_i32] : memref<8x!tpu.dma_semaphore, #tpu.memory_space<semaphore_mem>> -> memref<1x!tpu.dma_semaphore, #tpu.memory_space<semaphore_mem>>
    %5 = tpu.memref_squeeze %4 : memref<1x!tpu.dma_semaphore, #tpu.memory_space<semaphore_mem>> -> memref<!tpu.dma_semaphore, #tpu.memory_space<semaphore_mem>>
    tpu.enqueue_dma source(%2 : memref<1x32xf32, #tpu.memory_space<any>>) target(%3 : memref<1x32xf32, #tpu.memory_space<vmem>>) target_semaphore(%5 : memref<!tpu.dma_semaphore, #tpu.memory_space<semaphore_mem>>)
    %6 = arith.index_cast %arg0 : i32 to index
    %c1 = arith.constant 1 : index
    %7 = memref.load %arg1[%6, %c1] : memref<2x8xi32, #tpu.memory_space<smem>>
    %c1_i32 = arith.constant 1 : i32
    %c0_i32_3 = arith.constant 0 : i32
    %8 = tpu.memref_slice %arg2[%7, %c0_i32_3] : memref<64x32xf32, #tpu.memory_space<any>> -> memref<1x32xf32, #tpu.memory_space<any>>
    %c1_i32_4 = arith.constant 1 : i32
    %c0_i32_5 = arith.constant 0 : i32
    %9 = tpu.memref_slice %arg5[%c1_i32_4, %c0_i32_5] : memref<8x32xf32, #tpu.memory_space<vmem>> -> memref<1x32xf32, #tpu.memory_space<vmem>>
    %10 = tpu.memref_slice %arg6[%c1_i32] : memref<8x!tpu.dma_semaphore, #tpu.memory_space<semaphore_mem>> -> memref<1x!tpu.dma_semaphore, #tpu.memory_space<semaphore_mem>>
    %11 = tpu.memref_squeeze %10 : memref<1x!tpu.dma_semaphore, #tpu.memory_space<semaphore_mem>> -> memref<!tpu.dma_semaphore, #tpu.memory_space<semaphore_mem>>
    tpu.enqueue_dma source(%8 : memref<1x32xf32, #tpu.memory_space<any>>) target(%9 : memref<1x32xf32, #tpu.memory_space<vmem>>) target_semaphore(%11 : memref<!tpu.dma_semaphore, #tpu.memory_space<semaphore_mem>>)
    %12 = arith.index_cast %arg0 : i32 to index
    %c2 = arith.constant 2 : index
    %13 = memref.load %arg1[%12, %c2] : memref<2x8xi32, #tpu.memory_space<smem>>
    %c2_i32 = arith.constant 2 : i32
    %c0_i32_6 = arith.constant 0 : i32
    %14 = tpu.memref_slice %arg2[%13, %c0_i32_6] : memref<64x32xf32, #tpu.memory_space<any>> -> memref<1x32xf32, #tpu.memory_space<any>>
    %c2_i32_7 = arith.constant 2 : i32
    %c0_i32_8 = arith.constant 0 : i32
    %15 = tpu.memref_slice %arg5[%c2_i32_7, %c0_i32_8] : memref<8x32xf32, #tpu.memory_space<vmem>> -> memref<1x32xf32, #tpu.memory_space<vmem>>
    %16 = tpu.memref_slice %arg6[%c2_i32] : memref<8x!tpu.dma_semaphore, #tpu.memory_space<semaphore_mem>> -> memref<1x!tpu.dma_semaphore, #tpu.memory_space<semaphore_mem>>
    %17 = tpu.memref_squeeze %16 : memref<1x!tpu.dma_semaphore, #tpu.memory_space<semaphore_mem>> -> memref<!tpu.dma_semaphore, #tpu.memory_space<semaphore_mem>>
    tpu.enqueue_dma source(%14 : memref<1x32xf32, #tpu.memory_space<any>>) target(%15 : memref<1x32xf32, #tpu.memory_space<vmem>>) target_semaphore(%17 : memref<!tpu.dma_semaphore, #tpu.memory_space<semaphore_mem>>)
    %18 = arith.index_cast %arg0 : i32 to index
    %c3 = arith.constant 3 : index
    %19 = memref.load %arg1[%18, %c3] : memref<2x8xi32, #tpu.memory_space<smem>>
    %c3_i32 = arith.constant 3 : i32
    %c0_i32_9 = arith.constant 0 : i32
    %20 = tpu.memref_slice %arg2[%19, %c0_i32_9] : memref<64x32xf32, #tpu.memory_space<any>> -> memref<1x32xf32, #tpu.memory_space<any>>
    %c3_i32_10 = arith.constant 3 : i32
    %c0_i32_11 = arith.constant 0 : i32
    %21 = tpu.memref_slice %arg5[%c3_i32_10, %c0_i32_11] : memref<8x32xf32, #tpu.memory_space<vmem>> -> memref<1x32xf32, #tpu.memory_space<vmem>>
    %22 = tpu.memref_slice %arg6[%c3_i32] : memref<8x!tpu.dma_semaphore, #tpu.memory_space<semaphore_mem>> -> memref<1x!tpu.dma_semaphore, #tpu.memory_space<semaphore_mem>>
    %23 = tpu.memref_squeeze %22 : memref<1x!tpu.dma_semaphore, #tpu.memory_space<semaphore_mem>> -> memref<!tpu.dma_semaphore, #tpu.memory_space<semaphore_mem>>
    tpu.enqueue_dma source(%20 : memref<1x32xf32, #tpu.memory_space<any>>) target(%21 : memref<1x32xf32, #tpu.memory_space<vmem>>) target_semaphore(%23 : memref<!tpu.dma_semaphore, #tpu.memory_space<semaphore_mem>>)
    %24 = arith.index_cast %arg0 : i32 to index
    %c4 = arith.constant 4 : index
    %25 = memref.load %arg1[%24, %c4] : memref<2x8xi32, #tpu.memory_space<smem>>
    %c4_i32 = arith.constant 4 : i32
    %c0_i32_12 = arith.constant 0 : i32
    %26 = tpu.memref_slice %arg2[%25, %c0_i32_12] : memref<64x32xf32, #tpu.memory_space<any>> -> memref<1x32xf32, #tpu.memory_space<any>>
    %c4_i32_13 = arith.constant 4 : i32
    %c0_i32_14 = arith.constant 0 : i32
    %27 = tpu.memref_slice %arg5[%c4_i32_13, %c0_i32_14] : memref<8x32xf32, #tpu.memory_space<vmem>> -> memref<1x32xf32, #tpu.memory_space<vmem>>
    %28 = tpu.memref_slice %arg6[%c4_i32] : memref<8x!tpu.dma_semaphore, #tpu.memory_space<semaphore_mem>> -> memref<1x!tpu.dma_semaphore, #tpu.memory_space<semaphore_mem>>
    %29 = tpu.memref_squeeze %28 : memref<1x!tpu.dma_semaphore, #tpu.memory_space<semaphore_mem>> -> memref<!tpu.dma_semaphore, #tpu.memory_space<semaphore_mem>>
    tpu.enqueue_dma source(%26 : memref<1x32xf32, #tpu.memory_space<any>>) target(%27 : memref<1x32xf32, #tpu.memory_space<vmem>>) target_semaphore(%29 : memref<!tpu.dma_semaphore, #tpu.memory_space<semaphore_mem>>)
    %30 = arith.index_cast %arg0 : i32 to index
    %c5 = arith.constant 5 : index
    %31 = memref.load %arg1[%30, %c5] : memref<2x8xi32, #tpu.memory_space<smem>>
    %c5_i32 = arith.constant 5 : i32
    %c0_i32_15 = arith.constant 0 : i32
    %32 = tpu.memref_slice %arg2[%31, %c0_i32_15] : memref<64x32xf32, #tpu.memory_space<any>> -> memref<1x32xf32, #tpu.memory_space<any>>
    %c5_i32_16 = arith.constant 5 : i32
    %c0_i32_17 = arith.constant 0 : i32
    %33 = tpu.memref_slice %arg5[%c5_i32_16, %c0_i32_17] : memref<8x32xf32, #tpu.memory_space<vmem>> -> memref<1x32xf32, #tpu.memory_space<vmem>>
    %34 = tpu.memref_slice %arg6[%c5_i32] : memref<8x!tpu.dma_semaphore, #tpu.memory_space<semaphore_mem>> -> memref<1x!tpu.dma_semaphore, #tpu.memory_space<semaphore_mem>>
    %35 = tpu.memref_squeeze %34 : memref<1x!tpu.dma_semaphore, #tpu.memory_space<semaphore_mem>> -> memref<!tpu.dma_semaphore, #tpu.memory_space<semaphore_mem>>
    tpu.enqueue_dma source(%32 : memref<1x32xf32, #tpu.memory_space<any>>) target(%33 : memref<1x32xf32, #tpu.memory_space<vmem>>) target_semaphore(%35 : memref<!tpu.dma_semaphore, #tpu.memory_space<semaphore_mem>>)
    %36 = arith.index_cast %arg0 : i32 to index
    %c6 = arith.constant 6 : index
    %37 = memref.load %arg1[%36, %c6] : memref<2x8xi32, #tpu.memory_space<smem>>
    %c6_i32 = arith.constant 6 : i32
    %c0_i32_18 = arith.constant 0 : i32
    %38 = tpu.memref_slice %arg2[%37, %c0_i32_18] : memref<64x32xf32, #tpu.memory_space<any>> -> memref<1x32xf32, #tpu.memory_space<any>>
    %c6_i32_19 = arith.constant 6 : i32
    %c0_i32_20 = arith.constant 0 : i32
    %39 = tpu.memref_slice %arg5[%c6_i32_19, %c0_i32_20] : memref<8x32xf32, #tpu.memory_space<vmem>> -> memref<1x32xf32, #tpu.memory_space<vmem>>
    %40 = tpu.memref_slice %arg6[%c6_i32] : memref<8x!tpu.dma_semaphore, #tpu.memory_space<semaphore_mem>> -> memref<1x!tpu.dma_semaphore, #tpu.memory_space<semaphore_mem>>
    %41 = tpu.memref_squeeze %40 : memref<1x!tpu.dma_semaphore, #tpu.memory_space<semaphore_mem>> -> memref<!tpu.dma_semaphore, #tpu.memory_space<semaphore_mem>>
    tpu.enqueue_dma source(%38 : memref<1x32xf32, #tpu.memory_space<any>>) target(%39 : memref<1x32xf32, #tpu.memory_space<vmem>>) target_semaphore(%41 : memref<!tpu.dma_semaphore, #tpu.memory_space<semaphore_mem>>)
    %42 = arith.index_cast %arg0 : i32 to index
    %c7 = arith.constant 7 : index
    %43 = memref.load %arg1[%42, %c7] : memref<2x8xi32, #tpu.memory_space<smem>>
    %c7_i32 = arith.constant 7 : i32
    %c0_i32_21 = arith.constant 0 : i32
    %44 = tpu.memref_slice %arg2[%43, %c0_i32_21] : memref<64x32xf32, #tpu.memory_space<any>> -> memref<1x32xf32, #tpu.memory_space<any>>
    %c7_i32_22 = arith.constant 7 : i32
    %c0_i32_23 = arith.constant 0 : i32
    %45 = tpu.memref_slice %arg5[%c7_i32_22, %c0_i32_23] : memref<8x32xf32, #tpu.memory_space<vmem>> -> memref<1x32xf32, #tpu.memory_space<vmem>>
    %46 = tpu.memref_slice %arg6[%c7_i32] : memref<8x!tpu.dma_semaphore, #tpu.memory_space<semaphore_mem>> -> memref<1x!tpu.dma_semaphore, #tpu.memory_space<semaphore_mem>>
    %47 = tpu.memref_squeeze %46 : memref<1x!tpu.dma_semaphore, #tpu.memory_space<semaphore_mem>> -> memref<!tpu.dma_semaphore, #tpu.memory_space<semaphore_mem>>
    tpu.enqueue_dma source(%44 : memref<1x32xf32, #tpu.memory_space<any>>) target(%45 : memref<1x32xf32, #tpu.memory_space<vmem>>) target_semaphore(%47 : memref<!tpu.dma_semaphore, #tpu.memory_space<semaphore_mem>>)
    %c0_i32_24 = arith.constant 0 : i32
    %c0_i32_25 = arith.constant 0 : i32
    %48 = tpu.memref_slice %arg2[%1, %c0_i32_25] : memref<64x32xf32, #tpu.memory_space<any>> -> memref<1x32xf32, #tpu.memory_space<any>>
    %c0_i32_26 = arith.constant 0 : i32
    %c0_i32_27 = arith.constant 0 : i32
    %49 = tpu.memref_slice %arg5[%c0_i32_26, %c0_i32_27] : memref<8x32xf32, #tpu.memory_space<vmem>> -> memref<1x32xf32, #tpu.memory_space<vmem>>
    %50 = tpu.memref_slice %arg6[%c0_i32_24] : memref<8x!tpu.dma_semaphore, #tpu.memory_space<semaphore_mem>> -> memref<1x!tpu.dma_semaphore, #tpu.memory_space<semaphore_mem>>
    %51 = tpu.memref_squeeze %50 : memref<1x!tpu.dma_semaphore, #tpu.memory_space<semaphore_mem>> -> memref<!tpu.dma_semaphore, #tpu.memory_space<semaphore_mem>>
    tpu.wait_dma2 semaphore(%51 : memref<!tpu.dma_semaphore, #tpu.memory_space<semaphore_mem>>) src(%48 : memref<1x32xf32, #tpu.memory_space<any>>) dst(%49 : memref<1x32xf32, #tpu.memory_space<vmem>>)
    %c1_i32_28 = arith.constant 1 : i32
    %c0_i32_29 = arith.constant 0 : i32
    %52 = tpu.memref_slice %arg2[%7, %c0_i32_29] : memref<64x32xf32, #tpu.memory_space<any>> -> memref<1x32xf32, #tpu.memory_space<any>>
    %c1_i32_30 = arith.constant 1 : i32
    %c0_i32_31 = arith.constant 0 : i32
    %53 = tpu.memref_slice %arg5[%c1_i32_30, %c0_i32_31] : memref<8x32xf32, #tpu.memory_space<vmem>> -> memref<1x32xf32, #tpu.memory_space<vmem>>
    %54 = tpu.memref_slice %arg6[%c1_i32_28] : memref<8x!tpu.dma_semaphore, #tpu.memory_space<semaphore_mem>> -> memref<1x!tpu.dma_semaphore, #tpu.memory_space<semaphore_mem>>
    %55 = tpu.memref_squeeze %54 : memref<1x!tpu.dma_semaphore, #tpu.memory_space<semaphore_mem>> -> memref<!tpu.dma_semaphore, #tpu.memory_space<semaphore_mem>>
    tpu.wait_dma2 semaphore(%55 : memref<!tpu.dma_semaphore, #tpu.memory_space<semaphore_mem>>) src(%52 : memref<1x32xf32, #tpu.memory_space<any>>) dst(%53 : memref<1x32xf32, #tpu.memory_space<vmem>>)
    %c2_i32_32 = arith.constant 2 : i32
    %c0_i32_33 = arith.constant 0 : i32
    %56 = tpu.memref_slice %arg2[%13, %c0_i32_33] : memref<64x32xf32, #tpu.memory_space<any>> -> memref<1x32xf32, #tpu.memory_space<any>>
    %c2_i32_34 = arith.constant 2 : i32
    %c0_i32_35 = arith.constant 0 : i32
    %57 = tpu.memref_slice %arg5[%c2_i32_34, %c0_i32_35] : memref<8x32xf32, #tpu.memory_space<vmem>> -> memref<1x32xf32, #tpu.memory_space<vmem>>
    %58 = tpu.memref_slice %arg6[%c2_i32_32] : memref<8x!tpu.dma_semaphore, #tpu.memory_space<semaphore_mem>> -> memref<1x!tpu.dma_semaphore, #tpu.memory_space<semaphore_mem>>
    %59 = tpu.memref_squeeze %58 : memref<1x!tpu.dma_semaphore, #tpu.memory_space<semaphore_mem>> -> memref<!tpu.dma_semaphore, #tpu.memory_space<semaphore_mem>>
    tpu.wait_dma2 semaphore(%59 : memref<!tpu.dma_semaphore, #tpu.memory_space<semaphore_mem>>) src(%56 : memref<1x32xf32, #tpu.memory_space<any>>) dst(%57 : memref<1x32xf32, #tpu.memory_space<vmem>>)
    %c3_i32_36 = arith.constant 3 : i32
    %c0_i32_37 = arith.constant 0 : i32
    %60 = tpu.memref_slice %arg2[%19, %c0_i32_37] : memref<64x32xf32, #tpu.memory_space<any>> -> memref<1x32xf32, #tpu.memory_space<any>>
    %c3_i32_38 = arith.constant 3 : i32
    %c0_i32_39 = arith.constant 0 : i32
    %61 = tpu.memref_slice %arg5[%c3_i32_38, %c0_i32_39] : memref<8x32xf32, #tpu.memory_space<vmem>> -> memref<1x32xf32, #tpu.memory_space<vmem>>
    %62 = tpu.memref_slice %arg6[%c3_i32_36] : memref<8x!tpu.dma_semaphore, #tpu.memory_space<semaphore_mem>> -> memref<1x!tpu.dma_semaphore, #tpu.memory_space<semaphore_mem>>
    %63 = tpu.memref_squeeze %62 : memref<1x!tpu.dma_semaphore, #tpu.memory_space<semaphore_mem>> -> memref<!tpu.dma_semaphore, #tpu.memory_space<semaphore_mem>>
    tpu.wait_dma2 semaphore(%63 : memref<!tpu.dma_semaphore, #tpu.memory_space<semaphore_mem>>) src(%60 : memref<1x32xf32, #tpu.memory_space<any>>) dst(%61 : memref<1x32xf32, #tpu.memory_space<vmem>>)
    %c4_i32_40 = arith.constant 4 : i32
    %c0_i32_41 = arith.constant 0 : i32
    %64 = tpu.memref_slice %arg2[%25, %c0_i32_41] : memref<64x32xf32, #tpu.memory_space<any>> -> memref<1x32xf32, #tpu.memory_space<any>>
    %c4_i32_42 = arith.constant 4 : i32
    %c0_i32_43 = arith.constant 0 : i32
    %65 = tpu.memref_slice %arg5[%c4_i32_42, %c0_i32_43] : memref<8x32xf32, #tpu.memory_space<vmem>> -> memref<1x32xf32, #tpu.memory_space<vmem>>
    %66 = tpu.memref_slice %arg6[%c4_i32_40] : memref<8x!tpu.dma_semaphore, #tpu.memory_space<semaphore_mem>> -> memref<1x!tpu.dma_semaphore, #tpu.memory_space<semaphore_mem>>
    %67 = tpu.memref_squeeze %66 : memref<1x!tpu.dma_semaphore, #tpu.memory_space<semaphore_mem>> -> memref<!tpu.dma_semaphore, #tpu.memory_space<semaphore_mem>>
    tpu.wait_dma2 semaphore(%67 : memref<!tpu.dma_semaphore, #tpu.memory_space<semaphore_mem>>) src(%64 : memref<1x32xf32, #tpu.memory_space<any>>) dst(%65 : memref<1x32xf32, #tpu.memory_space<vmem>>)
    %c5_i32_44 = arith.constant 5 : i32
    %c0_i32_45 = arith.constant 0 : i32
    %68 = tpu.memref_slice %arg2[%31, %c0_i32_45] : memref<64x32xf32, #tpu.memory_space<any>> -> memref<1x32xf32, #tpu.memory_space<any>>
    %c5_i32_46 = arith.constant 5 : i32
    %c0_i32_47 = arith.constant 0 : i32
    %69 = tpu.memref_slice %arg5[%c5_i32_46, %c0_i32_47] : memref<8x32xf32, #tpu.memory_space<vmem>> -> memref<1x32xf32, #tpu.memory_space<vmem>>
    %70 = tpu.memref_slice %arg6[%c5_i32_44] : memref<8x!tpu.dma_semaphore, #tpu.memory_space<semaphore_mem>> -> memref<1x!tpu.dma_semaphore, #tpu.memory_space<semaphore_mem>>
    %71 = tpu.memref_squeeze %70 : memref<1x!tpu.dma_semaphore, #tpu.memory_space<semaphore_mem>> -> memref<!tpu.dma_semaphore, #tpu.memory_space<semaphore_mem>>
    tpu.wait_dma2 semaphore(%71 : memref<!tpu.dma_semaphore, #tpu.memory_space<semaphore_mem>>) src(%68 : memref<1x32xf32, #tpu.memory_space<any>>) dst(%69 : memref<1x32xf32, #tpu.memory_space<vmem>>)
    %c6_i32_48 = arith.constant 6 : i32
    %c0_i32_49 = arith.constant 0 : i32
    %72 = tpu.memref_slice %arg2[%37, %c0_i32_49] : memref<64x32xf32, #tpu.memory_space<any>> -> memref<1x32xf32, #tpu.memory_space<any>>
    %c6_i32_50 = arith.constant 6 : i32
    %c0_i32_51 = arith.constant 0 : i32
    %73 = tpu.memref_slice %arg5[%c6_i32_50, %c0_i32_51] : memref<8x32xf32, #tpu.memory_space<vmem>> -> memref<1x32xf32, #tpu.memory_space<vmem>>
    %74 = tpu.memref_slice %arg6[%c6_i32_48] : memref<8x!tpu.dma_semaphore, #tpu.memory_space<semaphore_mem>> -> memref<1x!tpu.dma_semaphore, #tpu.memory_space<semaphore_mem>>
    %75 = tpu.memref_squeeze %74 : memref<1x!tpu.dma_semaphore, #tpu.memory_space<semaphore_mem>> -> memref<!tpu.dma_semaphore, #tpu.memory_space<semaphore_mem>>
    tpu.wait_dma2 semaphore(%75 : memref<!tpu.dma_semaphore, #tpu.memory_space<semaphore_mem>>) src(%72 : memref<1x32xf32, #tpu.memory_space<any>>) dst(%73 : memref<1x32xf32, #tpu.memory_space<vmem>>)
    %c7_i32_52 = arith.constant 7 : i32
    %c0_i32_53 = arith.constant 0 : i32
    %76 = tpu.memref_slice %arg2[%43, %c0_i32_53] : memref<64x32xf32, #tpu.memory_space<any>> -> memref<1x32xf32, #tpu.memory_space<any>>
    %c7_i32_54 = arith.constant 7 : i32
    %c0_i32_55 = arith.constant 0 : i32
    %77 = tpu.memref_slice %arg5[%c7_i32_54, %c0_i32_55] : memref<8x32xf32, #tpu.memory_space<vmem>> -> memref<1x32xf32, #tpu.memory_space<vmem>>
    %78 = tpu.memref_slice %arg6[%c7_i32_52] : memref<8x!tpu.dma_semaphore, #tpu.memory_space<semaphore_mem>> -> memref<1x!tpu.dma_semaphore, #tpu.memory_space<semaphore_mem>>
    %79 = tpu.memref_squeeze %78 : memref<1x!tpu.dma_semaphore, #tpu.memory_space<semaphore_mem>> -> memref<!tpu.dma_semaphore, #tpu.memory_space<semaphore_mem>>
    tpu.wait_dma2 semaphore(%79 : memref<!tpu.dma_semaphore, #tpu.memory_space<semaphore_mem>>) src(%76 : memref<1x32xf32, #tpu.memory_space<any>>) dst(%77 : memref<1x32xf32, #tpu.memory_space<vmem>>)
    %c0_56 = arith.constant 0 : index
    %c0_57 = arith.constant 0 : index
    %80 = vector.load %arg5[%c0_56, %c0_57] : memref<8x32xf32, #tpu.memory_space<vmem>>, vector<8x32xf32>
    %c0_58 = arith.constant 0 : index
    %c0_59 = arith.constant 0 : index
    %81 = vector.load %arg3[%c0_58, %c0_59] : memref<8x32xf32, #tpu.memory_space<vmem>>, vector<8x32xf32>
    %82 = arith.addf %80, %81 : vector<8x32xf32>
    %83 = vector.shape_cast %82 : vector<8x32xf32> to vector<1x8x32xf32>
    %c0_60 = arith.constant 0 : index
    %c0_61 = arith.constant 0 : index
    %c0_62 = arith.constant 0 : index
    %84 = vector.load %arg4[%c0_60, %c0_61, %c0_62] : memref<1x8x32xf32, #tpu.memory_space<vmem>>, vector<1x8x32xf32>
    tpu.vector_store %arg4[%c0_60, %c0_61, %c0_62], %83 {strides = array<i32>} : memref<1x8x32xf32, #tpu.memory_space<vmem>>, vector<1x8x32xf32>,
    return
  }
  func.func @transform_1(%arg0: i32, %arg1: memref<2x8xi32, #tpu.memory_space<smem>>) -> (i32, i32) {
    %c0_i32 = arith.constant 0 : i32
    %c0_i32_0 = arith.constant 0 : i32
    %c0_i32_1 = arith.constant 0 : i32
    return %c0_i32, %c0_i32_0 : i32, i32
  }
  func.func @transform_2(%arg0: i32, %arg1: memref<2x8xi32, #tpu.memory_space<smem>>) -> (i32, i32, i32) {
    %c0_i32 = arith.constant 0 : i32
    %c0_i32_0 = arith.constant 0 : i32
    %c0_i32_1 = arith.constant 0 : i32
    return %arg0, %c0_i32, %c0_i32_0 : i32, i32, i32
  }
}

</mosaic_0001>

<llo_original>
// kernel: tpu_custom_call.1
$region0: #{tpu_custom_call.1}
  #allocation0 [shape = 'u32[]', space=smem, size = 0x4, offset = 0x4, fixed_abs, tag = 'smem constant byte address 0x4 - core index']
  #allocation1 [shape = 'u32[144,128]{1,0:T(1,128)}', space=vmem, size = 0x12000, scoped, tag = 'internal scratch']
  #allocation2 [shape = 'f32[8,32]{1,0:T(8,128)}', space=vmem, size = 0x1000, scoped, tag = 'scratch operand']
  #allocation3 [shape = 's32[8]{0}', space=sflag, size = 0x20, scoped, tag = 'scratch operand']
  #allocation4 [shape = 's32[1]{0}', space=sflag, size = 0x4, scoped, tag = 'scoped memory for tpu_custom_call.1']
  #allocation5 [shape = 'u8[1024]{0}', space=smem, size = 0x400, scoped, tag = 'prefetched SMEM operand 0']
  #allocation8 [shape = 's32[]', space=sflag, size = 0x4, offset = 0, fixed_abs, tag = 'sflag constant byte address 0x0 - dummy sync flag']
  #allocation9 [shape = 's32[]', space=sflag, size = 0x4, offset = 0, fixed_abs, tag = 'sflag constant byte address 0x0 - dummy sync flag']
  #allocation10 [shape = 's32[]', space=sflag, size = 0x4, offset = 0, fixed_abs, tag = 'sflag constant byte address 0x0 - dummy sync flag']
  #allocation11 [shape = 's32[]', space=sflag, size = 0x4, offset = 0, fixed_abs, tag = 'sflag constant byte address 0x0 - dummy sync flag']
  #allocation12 [shape = 's32[]', space=sflag, size = 0x4, offset = 0, fixed_abs, tag = 'sflag constant byte address 0x0 - dummy sync flag']
  #allocation13 [shape = 's32[]', space=sflag, size = 0x4, offset = 0, fixed_abs, tag = 'sflag constant byte address 0x0 - dummy sync flag']
  #allocation14 [shape = 's32[]', space=sflag, size = 0x4, offset = 0, fixed_abs, tag = 'sflag constant byte address 0x0 - dummy sync flag']
  #allocation15 [shape = 's32[]', space=sflag, size = 0x4, offset = 0, fixed_abs, tag = 'sflag constant byte address 0x0 - dummy sync flag']
  %s0 = inlined_call_operand.vmem [shape: s32[2,8], index: 0, kind: input, shape index: {}]
  %s1 = inlined_call_operand.vmem [shape: f32[64,32], index: 1, kind: input, shape index: {}]
  %s2 = inlined_call_operand.vmem [shape: f32[8,32], index: 2, kind: input, shape index: {}]
  %s3 = inlined_call_operand.hbm [shape: f32[2,8,32], index: 3, kind: output, shape index: {}]
  %s4 = sld [smem:[#allocation0]]
  $region277: #{tpu_custom_call.1} parent=0
    _
  %s6 = ssub.s32 1, %s4
  %s7 = scalar_select 0, %s6, %s4
  %s8 = sshll.u32 %s0, 4
  %s9 = int_to_ptr.vmem [resolvable:$true] %s8
  %11 = dma.vmem_to_smem %s9, 32, [#allocation5], [#allocation4]
  %12 = dma.done [#allocation4], 32
  %13 = sfence
  $region1: #{tpu_custom_call.1} parent=0
    #allocation6 [shape = 'u8[8192]{0}', space=vmem, size = 0x2000, scoped, tag = 'output window, operand 0']
    #allocation7 [shape = 's32[2]{0}', space=sflag, size = 0x8, scoped, tag = 'scoped memory for tpu_custom_call.1']
    %14 = vsyncpa [#allocation7], 0
    %s15 = scalar_lea.sflag [#allocation7], 1
    %16 = vsyncpa %s15, 0
    loop: start=0, step=1, limit=4
    $region2: #{tpu_custom_call.1} parent=1 // loop_pre_header
      _
    $region3: #{tpu_custom_call.1} parent=1 // loop_header
      %s18 = sphi 0, %s22
      %p19 = scmp.ge.s32.totalorder %s18, 4
      %s26 = sphi 0, %s26
      %s28 = sphi 0, %s26
      %s29 = sphi 0, %s28
      %s43 = sphi 0, %s29
      %s49 = sphi 0, %s51
      %s52 = sphi 0, %s49
      %s53 = sphi 0, %s52
      %s69 = sphi 0, %s53
    $region4: #{tpu_custom_call.1} parent=1 // loop_header_branch
      %21 = sbr.rel (%p19) target = $region8
    $region5: #{tpu_custom_call.1} parent=1 // loop_body
      %s23 = ssub.s32 %s18, 1
      %s24 = ssub.s32 %s18, 2
      %s25 = sadd.s32 %s18, 1
      %s27 = sadd.s32 %s26, 1
      %p30 = scmp.eq.s32.totalorder %s18, 1
      %p31 = scmp.ne.s32.totalorder %s26, %s28
      %p32 = scmp.eq.s32.totalorder %s18, 0
      %p33 = por %p31, %p32
      %p34 = scmp.ne.s32.totalorder %s26, %s28
      %p35 = scmp.eq.s32.totalorder %s23, 1
      %p36 = por %p34, %p35
      %p37 = scmp.ne.s32.totalorder %s28, %s29
      %p38 = scmp.eq.s32.totalorder %s23, 0
      %p39 = por %p37, %p38
      %p40 = scmp.ne.s32.totalorder %s28, %s29
      %p41 = scmp.eq.s32.totalorder %s24, 1
      %p42 = por %p40, %p41
      %p44 = scmp.ne.s32.totalorder %s29, %s43
      %p45 = scmp.eq.s32.totalorder %s24, 0
      %p46 = por %p44, %p45
      %s47 = ssub.s32 %s18, %s25
      %p48 = scmp.eq.s32.totalorder %s47, 0
      %s50 = sadd.s32 %s49, 1
      %s51 = scalar_select %p48, %s49, %s50
      %p54 = pneg %p48
      %p55 = scmp.eq.s32.totalorder %s18, 1
      %p56 = por %p54, %p55
      %p57 = scmp.ne.s32.totalorder %s49, %s52
      %p58 = scmp.eq.s32.totalorder %s18, 0
      %p59 = por %p57, %p58
      %p60 = scmp.ne.s32.totalorder %s49, %s52
      %p61 = scmp.eq.s32.totalorder %s23, 1
      %p62 = por %p60, %p61
      %p63 = scmp.ne.s32.totalorder %s52, %s53
      %p64 = scmp.eq.s32.totalorder %s23, 0
      %p65 = por %p63, %p64
      %p66 = scmp.ne.s32.totalorder %s52, %s53
      %p67 = scmp.eq.s32.totalorder %s24, 1
      %p68 = por %p66, %p67
      %p70 = scmp.ne.s32.totalorder %s53, %s69
      %p71 = scmp.eq.s32.totalorder %s24, 0
      %p72 = por %p70, %p71
      %p73 = scmp.le.s32.totalorder 1, %s18
      %p74 = scmp.lt.s32.totalorder %s18, 3
      %p75 = pnand %p73, %p74
      %p76 = pneg %p75
      // Predicated region
      $region9: #{tpu_custom_call.1} parent=5 // pred_check
        _
      $region10: #{tpu_custom_call.1} parent=5 // pred_check_branch
        %78 = sbr.rel (%p75) target = $region12
      $region11: #{tpu_custom_call.1} parent=5 // pred_region
        %s79 = ssub.s32 %s18, 1
        // Predicated region
        $region13: #{tpu_custom_call.1} parent=11 // pred_check
          %p80 = pneg %p39
        $region14: #{tpu_custom_call.1} parent=11 // pred_check_branch
          %82 = sbr.rel (%p80) target = $region16
        $region15: #{tpu_custom_call.1} parent=11 // pred_region
          _
        $region16: #{tpu_custom_call.1} parent=11 // pred_fallthru
          _
      $region12: #{tpu_custom_call.1} parent=5 // pred_fallthru
        _
      %p83 = scmp.lt.s32.totalorder %s18, 2
      // Predicated region
      $region17: #{tpu_custom_call.1} parent=5 // pred_check
        %p84 = pneg %p83
      $region18: #{tpu_custom_call.1} parent=5 // pred_check_branch
        %86 = sbr.rel (%p84) target = $region20
      $region19: #{tpu_custom_call.1} parent=5 // pred_region
        _
      $region20: #{tpu_custom_call.1} parent=5 // pred_fallthru
        _
      %p87 = scmp.le.s32.totalorder 1, %s18
      %p88 = scmp.lt.s32.totalorder %s18, 3
      %p89 = pnand %p87, %p88
      %p90 = pneg %p89
      // Predicated region
      $region21: #{tpu_custom_call.1} parent=5 // pred_check
        _
      $region22: #{tpu_custom_call.1} parent=5 // pred_check_branch
        %92 = sbr.rel (%p89) target = $region24
      $region23: #{tpu_custom_call.1} parent=5 // pred_region
        %s93 = ssub.s32 %s18, 1
        %p94 = pneg %p39
        %p95 = pneg %p36
        %p96 = pneg %p65
        %p97 = pneg %p62
        %s98 = sand.u32 %s52, 1
        %s99 = scalar_lea.sflag [#allocation7], %s98
        %s100 = sand.u32 %s52, 1
        %s101 = smul.addr %s100, 8
        %s102 = scalar_lea.vmem [#allocation6], %s101
        %s103 = smul.u32 %s23, 128
        %s104 = sld [smem:[#allocation5 + %s103]]
        %s105 = scalar_lea.vmem %s1, %s104
        %p107 = scmp.lt.u32.totalorder 1, 8
        %p108 = pneg %p107
        // Predicated region
        $region25: #{tpu_custom_call.1} parent=23 // pred_check
          _
        $region26: #{tpu_custom_call.1} parent=23 // pred_check_branch
          %110 = sbr.rel (%p107) target = $region28
        $region27: #{tpu_custom_call.1} parent=23 // pred_region
          %s125 = sand.u32 1, 7
          %p126 = scmp.eq.s32.totalorder %s125, 0
          %p127 = pneg %p126
          // Predicated region
          $region40: #{tpu_custom_call.1} parent=27 // pred_check
            _
          $region41: #{tpu_custom_call.1} parent=27 // pred_check_branch
            %129 = sbr.rel (%p126) target = $region43
          $region42: #{tpu_custom_call.1} parent=27 // pred_region
            %s130 = sand.u32 1, 7
            %s131 = ssub.s32 1, %s130
            %s132 = scalar_lea.vmem %s105, %s131
            %s133 = ssub.s32 1, %s130
            %s134 = scalar_lea.vmem [#allocation2], %s133
            %s135 = sshllo.u32 0, %s130
            loop: start=0, step=1, limit=1
            $region44: #{tpu_custom_call.1} parent=42 // loop_pre_header
              _
            $region45: #{tpu_custom_call.1} parent=42 // loop_header
              %s137 = sphi 0, %s141
              %p138 = scmp.ge.s32.totalorder %s137, 1
              %s142 = sphi %s132, %s132
              %s143 = sphi %s134, %s134
            $region46: #{tpu_custom_call.1} parent=42 // loop_header_branch
              %140 = sbr.rel (%p138) target = $region50
            $region47: #{tpu_custom_call.1} parent=42 // loop_body
              %v144 = vld [vmem:[%s142] sm:%s135]
              %145 = vst [vmem:[%s143] sm:%s135] %v144
            $region48: #{tpu_custom_call.1} parent=42 // loop_footer
              %s141 = sadd.s32 1, %s137
            $region49: #{tpu_custom_call.1} parent=42 // loop_footer_branch
              %136 = sbr.rel target = $region45
            $region50: #{tpu_custom_call.1} parent=42 // loop_exit
              _
          $region43: #{tpu_custom_call.1} parent=27 // pred_fallthru
            _
        $region28: #{tpu_custom_call.1} parent=23 // pred_fallthru
          _
        // Predicated region
        $region29: #{tpu_custom_call.1} parent=23 // pred_check
          %p111 = pneg %p107
        $region30: #{tpu_custom_call.1} parent=23 // pred_check_branch
          %113 = sbr.rel (%p111) target = $region32
        $region31: #{tpu_custom_call.1} parent=23 // pred_region
          %s114 = sshllo.u32 0, 1
          loop: start=0, step=1, limit=1
          $region33: #{tpu_custom_call.1} parent=31 // loop_pre_header
            _
          $region34: #{tpu_custom_call.1} parent=31 // loop_header
            %s116 = sphi 0, %s120
            %p117 = scmp.ge.s32.totalorder %s116, 1
            %s121 = sphi %s105, %s105
            %s122 = sphi [#allocation2], [#allocation2]
          $region35: #{tpu_custom_call.1} parent=31 // loop_header_branch
            %119 = sbr.rel (%p117) target = $region39
          $region36: #{tpu_custom_call.1} parent=31 // loop_body
            %v123 = vld [vmem:[%s121] sm:%s114]
            %124 = vst [vmem:[%s122] sm:%s114] %v123
          $region37: #{tpu_custom_call.1} parent=31 // loop_footer
            %s120 = sadd.s32 1, %s116
          $region38: #{tpu_custom_call.1} parent=31 // loop_footer_branch
            %115 = sbr.rel target = $region34
          $region39: #{tpu_custom_call.1} parent=31 // loop_exit
            _
        $region32: #{tpu_custom_call.1} parent=23 // pred_fallthru
          _
        // Predicated region
        $region51: #{tpu_custom_call.1} parent=23 // pred_check
          _
        $region52: #{tpu_custom_call.1} parent=23 // pred_check_branch
          %148 = sbr.rel (0) target = $region54
        $region53: #{tpu_custom_call.1} parent=23 // pred_region
          %149 = vsyncadd [#allocation3], 16
        $region54: #{tpu_custom_call.1} parent=23 // pred_fallthru
          _
        %s150 = sadd.s32 %s103, 1
        %s151 = sld [smem:[#allocation5 + %s150]]
        %s152 = scalar_lea.vmem %s1, %s151
        %s153 = scalar_lea.vmem [#allocation2], 1
        %s154 = scalar_lea.sflag [#allocation3], 1
        %p156 = scmp.lt.u32.totalorder 1, 8
        %p157 = pneg %p156
        // Predicated region
        $region55: #{tpu_custom_call.1} parent=23 // pred_check
          _
        $region56: #{tpu_custom_call.1} parent=23 // pred_check_branch
          %159 = sbr.rel (%p156) target = $region58
        $region57: #{tpu_custom_call.1} parent=23 // pred_region
          %s174 = sand.u32 1, 7
          %p175 = scmp.eq.s32.totalorder %s174, 0
          %p176 = pneg %p175
          // Predicated region
          $region70: #{tpu_custom_call.1} parent=57 // pred_check
            _
          $region71: #{tpu_custom_call.1} parent=57 // pred_check_branch
            %178 = sbr.rel (%p175) target = $region73
          $region72: #{tpu_custom_call.1} parent=57 // pred_region
            %s179 = sand.u32 1, 7
            %s180 = ssub.s32 1, %s179
            %s181 = scalar_lea.vmem %s152, %s180
            %s182 = ssub.s32 1, %s179
            %s183 = scalar_lea.vmem %s153, %s182 [#allocation2]
            %s184 = sshllo.u32 0, %s179
            loop: start=0, step=1, limit=1
            $region74: #{tpu_custom_call.1} parent=72 // loop_pre_header
              _
            $region75: #{tpu_custom_call.1} parent=72 // loop_header
              %s186 = sphi 0, %s190
              %p187 = scmp.ge.s32.totalorder %s186, 1
              %s191 = sphi %s181, %s181
              %s192 = sphi %s183, %s183
            $region76: #{tpu_custom_call.1} parent=72 // loop_header_branch
              %189 = sbr.rel (%p187) target = $region80
            $region77: #{tpu_custom_call.1} parent=72 // loop_body
              %v193 = vld [vmem:[%s191] sm:%s184]
              %194 = vst [vmem:[%s192] sm:%s184] %v193
            $region78: #{tpu_custom_call.1} parent=72 // loop_footer
              %s190 = sadd.s32 1, %s186
            $region79: #{tpu_custom_call.1} parent=72 // loop_footer_branch
              %185 = sbr.rel target = $region75
            $region80: #{tpu_custom_call.1} parent=72 // loop_exit
              _
          $region73: #{tpu_custom_call.1} parent=57 // pred_fallthru
            _
        $region58: #{tpu_custom_call.1} parent=23 // pred_fallthru
          _
        // Predicated region
        $region59: #{tpu_custom_call.1} parent=23 // pred_check
          %p160 = pneg %p156
        $region60: #{tpu_custom_call.1} parent=23 // pred_check_branch
          %162 = sbr.rel (%p160) target = $region62
        $region61: #{tpu_custom_call.1} parent=23 // pred_region
          %s163 = sshllo.u32 0, 1
          loop: start=0, step=1, limit=1
          $region63: #{tpu_custom_call.1} parent=61 // loop_pre_header
            _
          $region64: #{tpu_custom_call.1} parent=61 // loop_header
            %s165 = sphi 0, %s169
            %p166 = scmp.ge.s32.totalorder %s165, 1
            %s170 = sphi %s152, %s152
            %s171 = sphi %s153, %s153
          $region65: #{tpu_custom_call.1} parent=61 // loop_header_branch
            %168 = sbr.rel (%p166) target = $region69
          $region66: #{tpu_custom_call.1} parent=61 // loop_body
            %v172 = vld [vmem:[%s170] sm:%s163]
            %173 = vst [vmem:[%s171] sm:%s163] %v172
          $region67: #{tpu_custom_call.1} parent=61 // loop_footer
            %s169 = sadd.s32 1, %s165
          $region68: #{tpu_custom_call.1} parent=61 // loop_footer_branch
            %164 = sbr.rel target = $region64
          $region69: #{tpu_custom_call.1} parent=61 // loop_exit
            _
        $region62: #{tpu_custom_call.1} parent=23 // pred_fallthru
          _
        // Predicated region
        $region81: #{tpu_custom_call.1} parent=23 // pred_check
          _
        $region82: #{tpu_custom_call.1} parent=23 // pred_check_branch
          %197 = sbr.rel (0) target = $region84
        $region83: #{tpu_custom_call.1} parent=23 // pred_region
          %198 = vsyncadd %s154, 16
        $region84: #{tpu_custom_call.1} parent=23 // pred_fallthru
          _
        %s199 = sadd.s32 %s103, 2
        %s200 = sld [smem:[#allocation5 + %s199]]
        %s201 = scalar_lea.vmem %s1, %s200
        %s202 = scalar_lea.vmem [#allocation2], 2
        %s203 = scalar_lea.sflag [#allocation3], 2
        %p205 = scmp.lt.u32.totalorder 1, 8
        %p206 = pneg %p205
        // Predicated region
        $region85: #{tpu_custom_call.1} parent=23 // pred_check
          _
        $region86: #{tpu_custom_call.1} parent=23 // pred_check_branch
          %208 = sbr.rel (%p205) target = $region88
        $region87: #{tpu_custom_call.1} parent=23 // pred_region
          %s223 = sand.u32 1, 7
          %p224 = scmp.eq.s32.totalorder %s223, 0
          %p225 = pneg %p224
          // Predicated region
          $region100: #{tpu_custom_call.1} parent=87 // pred_check
            _
          $region101: #{tpu_custom_call.1} parent=87 // pred_check_branch
            %227 = sbr.rel (%p224) target = $region103
          $region102: #{tpu_custom_call.1} parent=87 // pred_region
            %s228 = sand.u32 1, 7
            %s229 = ssub.s32 1, %s228
            %s230 = scalar_lea.vmem %s201, %s229
            %s231 = ssub.s32 1, %s228
            %s232 = scalar_lea.vmem %s202, %s231 [#allocation2]
            %s233 = sshllo.u32 0, %s228
            loop: start=0, step=1, limit=1
            $region104: #{tpu_custom_call.1} parent=102 // loop_pre_header
              _
            $region105: #{tpu_custom_call.1} parent=102 // loop_header
              %s235 = sphi 0, %s239
              %p236 = scmp.ge.s32.totalorder %s235, 1
              %s240 = sphi %s230, %s230
              %s241 = sphi %s232, %s232
            $region106: #{tpu_custom_call.1} parent=102 // loop_header_branch
              %238 = sbr.rel (%p236) target = $region110
            $region107: #{tpu_custom_call.1} parent=102 // loop_body
              %v242 = vld [vmem:[%s240] sm:%s233]
              %243 = vst [vmem:[%s241] sm:%s233] %v242
            $region108: #{tpu_custom_call.1} parent=102 // loop_footer
              %s239 = sadd.s32 1, %s235
            $region109: #{tpu_custom_call.1} parent=102 // loop_footer_branch
              %234 = sbr.rel target = $region105
            $region110: #{tpu_custom_call.1} parent=102 // loop_exit
              _
          $region103: #{tpu_custom_call.1} parent=87 // pred_fallthru
            _
        $region88: #{tpu_custom_call.1} parent=23 // pred_fallthru
          _
        // Predicated region
        $region89: #{tpu_custom_call.1} parent=23 // pred_check
          %p209 = pneg %p205
        $region90: #{tpu_custom_call.1} parent=23 // pred_check_branch
          %211 = sbr.rel (%p209) target = $region92
        $region91: #{tpu_custom_call.1} parent=23 // pred_region
          %s212 = sshllo.u32 0, 1
          loop: start=0, step=1, limit=1
          $region93: #{tpu_custom_call.1} parent=91 // loop_pre_header
            _
          $region94: #{tpu_custom_call.1} parent=91 // loop_header
            %s214 = sphi 0, %s218
            %p215 = scmp.ge.s32.totalorder %s214, 1
            %s219 = sphi %s201, %s201
            %s220 = sphi %s202, %s202
          $region95: #{tpu_custom_call.1} parent=91 // loop_header_branch
            %217 = sbr.rel (%p215) target = $region99
          $region96: #{tpu_custom_call.1} parent=91 // loop_body
            %v221 = vld [vmem:[%s219] sm:%s212]
            %222 = vst [vmem:[%s220] sm:%s212] %v221
          $region97: #{tpu_custom_call.1} parent=91 // loop_footer
            %s218 = sadd.s32 1, %s214
          $region98: #{tpu_custom_call.1} parent=91 // loop_footer_branch
            %213 = sbr.rel target = $region94
          $region99: #{tpu_custom_call.1} parent=91 // loop_exit
            _
        $region92: #{tpu_custom_call.1} parent=23 // pred_fallthru
          _
        // Predicated region
        $region111: #{tpu_custom_call.1} parent=23 // pred_check
          _
        $region112: #{tpu_custom_call.1} parent=23 // pred_check_branch
          %246 = sbr.rel (0) target = $region114
        $region113: #{tpu_custom_call.1} parent=23 // pred_region
          %247 = vsyncadd %s203, 16
        $region114: #{tpu_custom_call.1} parent=23 // pred_fallthru
          _
        %s248 = sadd.s32 %s103, 3
        %s249 = sld [smem:[#allocation5 + %s248]]
        %s250 = scalar_lea.vmem %s1, %s249
        %s251 = scalar_lea.vmem [#allocation2], 3
        %s252 = scalar_lea.sflag [#allocation3], 3
        %p254 = scmp.lt.u32.totalorder 1, 8
        %p255 = pneg %p254
        // Predicated region
        $region115: #{tpu_custom_call.1} parent=23 // pred_check
          _
        $region116: #{tpu_custom_call.1} parent=23 // pred_check_branch
          %257 = sbr.rel (%p254) target = $region118
        $region117: #{tpu_custom_call.1} parent=23 // pred_region
          %s272 = sand.u32 1, 7
          %p273 = scmp.eq.s32.totalorder %s272, 0
          %p274 = pneg %p273
          // Predicated region
          $region130: #{tpu_custom_call.1} parent=117 // pred_check
            _
          $region131: #{tpu_custom_call.1} parent=117 // pred_check_branch
            %276 = sbr.rel (%p273) target = $region133
          $region132: #{tpu_custom_call.1} parent=117 // pred_region
            %s277 = sand.u32 1, 7
            %s278 = ssub.s32 1, %s277
            %s279 = scalar_lea.vmem %s250, %s278
            %s280 = ssub.s32 1, %s277
            %s281 = scalar_lea.vmem %s251, %s280 [#allocation2]
            %s282 = sshllo.u32 0, %s277
            loop: start=0, step=1, limit=1
            $region134: #{tpu_custom_call.1} parent=132 // loop_pre_header
              _
            $region135: #{tpu_custom_call.1} parent=132 // loop_header
              %s284 = sphi 0, %s288
              %p285 = scmp.ge.s32.totalorder %s284, 1
              %s289 = sphi %s279, %s279
              %s290 = sphi %s281, %s281
            $region136: #{tpu_custom_call.1} parent=132 // loop_header_branch
              %287 = sbr.rel (%p285) target = $region140
            $region137: #{tpu_custom_call.1} parent=132 // loop_body
              %v291 = vld [vmem:[%s289] sm:%s282]
              %292 = vst [vmem:[%s290] sm:%s282] %v291
            $region138: #{tpu_custom_call.1} parent=132 // loop_footer
              %s288 = sadd.s32 1, %s284
            $region139: #{tpu_custom_call.1} parent=132 // loop_footer_branch
              %283 = sbr.rel target = $region135
            $region140: #{tpu_custom_call.1} parent=132 // loop_exit
              _
          $region133: #{tpu_custom_call.1} parent=117 // pred_fallthru
            _
        $region118: #{tpu_custom_call.1} parent=23 // pred_fallthru
          _
        // Predicated region
        $region119: #{tpu_custom_call.1} parent=23 // pred_check
          %p258 = pneg %p254
        $region120: #{tpu_custom_call.1} parent=23 // pred_check_branch
          %260 = sbr.rel (%p258) target = $region122
        $region121: #{tpu_custom_call.1} parent=23 // pred_region
          %s261 = sshllo.u32 0, 1
          loop: start=0, step=1, limit=1
          $region123: #{tpu_custom_call.1} parent=121 // loop_pre_header
            _
          $region124: #{tpu_custom_call.1} parent=121 // loop_header
            %s263 = sphi 0, %s267
            %p264 = scmp.ge.s32.totalorder %s263, 1
            %s268 = sphi %s250, %s250
            %s269 = sphi %s251, %s251
          $region125: #{tpu_custom_call.1} parent=121 // loop_header_branch
            %266 = sbr.rel (%p264) target = $region129
          $region126: #{tpu_custom_call.1} parent=121 // loop_body
            %v270 = vld [vmem:[%s268] sm:%s261]
            %271 = vst [vmem:[%s269] sm:%s261] %v270
          $region127: #{tpu_custom_call.1} parent=121 // loop_footer
            %s267 = sadd.s32 1, %s263
          $region128: #{tpu_custom_call.1} parent=121 // loop_footer_branch
            %262 = sbr.rel target = $region124
          $region129: #{tpu_custom_call.1} parent=121 // loop_exit
            _
        $region122: #{tpu_custom_call.1} parent=23 // pred_fallthru
          _
        // Predicated region
        $region141: #{tpu_custom_call.1} parent=23 // pred_check
          _
        $region142: #{tpu_custom_call.1} parent=23 // pred_check_branch
          %295 = sbr.rel (0) target = $region144
        $region143: #{tpu_custom_call.1} parent=23 // pred_region
          %296 = vsyncadd %s252, 16
        $region144: #{tpu_custom_call.1} parent=23 // pred_fallthru
          _
        %s297 = sadd.s32 %s103, 4
        %s298 = sld [smem:[#allocation5 + %s297]]
        %s299 = scalar_lea.vmem %s1, %s298
        %s300 = scalar_lea.vmem [#allocation2], 4
        %s301 = scalar_lea.sflag [#allocation3], 4
        %p303 = scmp.lt.u32.totalorder 1, 8
        %p304 = pneg %p303
        // Predicated region
        $region145: #{tpu_custom_call.1} parent=23 // pred_check
          _
        $region146: #{tpu_custom_call.1} parent=23 // pred_check_branch
          %306 = sbr.rel (%p303) target = $region148
        $region147: #{tpu_custom_call.1} parent=23 // pred_region
          %s321 = sand.u32 1, 7
          %p322 = scmp.eq.s32.totalorder %s321, 0
          %p323 = pneg %p322
          // Predicated region
          $region160: #{tpu_custom_call.1} parent=147 // pred_check
            _
          $region161: #{tpu_custom_call.1} parent=147 // pred_check_branch
            %325 = sbr.rel (%p322) target = $region163
          $region162: #{tpu_custom_call.1} parent=147 // pred_region
            %s326 = sand.u32 1, 7
            %s327 = ssub.s32 1, %s326
            %s328 = scalar_lea.vmem %s299, %s327
            %s329 = ssub.s32 1, %s326
            %s330 = scalar_lea.vmem %s300, %s329 [#allocation2]
            %s331 = sshllo.u32 0, %s326
            loop: start=0, step=1, limit=1
            $region164: #{tpu_custom_call.1} parent=162 // loop_pre_header
              _
            $region165: #{tpu_custom_call.1} parent=162 // loop_header
              %s333 = sphi 0, %s337
              %p334 = scmp.ge.s32.totalorder %s333, 1
              %s338 = sphi %s328, %s328
              %s339 = sphi %s330, %s330
            $region166: #{tpu_custom_call.1} parent=162 // loop_header_branch
              %336 = sbr.rel (%p334) target = $region170
            $region167: #{tpu_custom_call.1} parent=162 // loop_body
              %v340 = vld [vmem:[%s338] sm:%s331]
              %341 = vst [vmem:[%s339] sm:%s331] %v340
            $region168: #{tpu_custom_call.1} parent=162 // loop_footer
              %s337 = sadd.s32 1, %s333
            $region169: #{tpu_custom_call.1} parent=162 // loop_footer_branch
              %332 = sbr.rel target = $region165
            $region170: #{tpu_custom_call.1} parent=162 // loop_exit
              _
          $region163: #{tpu_custom_call.1} parent=147 // pred_fallthru
            _
        $region148: #{tpu_custom_call.1} parent=23 // pred_fallthru
          _
        // Predicated region
        $region149: #{tpu_custom_call.1} parent=23 // pred_check
          %p307 = pneg %p303
        $region150: #{tpu_custom_call.1} parent=23 // pred_check_branch
          %309 = sbr.rel (%p307) target = $region152
        $region151: #{tpu_custom_call.1} parent=23 // pred_region
          %s310 = sshllo.u32 0, 1
          loop: start=0, step=1, limit=1
          $region153: #{tpu_custom_call.1} parent=151 // loop_pre_header
            _
          $region154: #{tpu_custom_call.1} parent=151 // loop_header
            %s312 = sphi 0, %s316
            %p313 = scmp.ge.s32.totalorder %s312, 1
            %s317 = sphi %s299, %s299
            %s318 = sphi %s300, %s300
          $region155: #{tpu_custom_call.1} parent=151 // loop_header_branch
            %315 = sbr.rel (%p313) target = $region159
          $region156: #{tpu_custom_call.1} parent=151 // loop_body
            %v319 = vld [vmem:[%s317] sm:%s310]
            %320 = vst [vmem:[%s318] sm:%s310] %v319
          $region157: #{tpu_custom_call.1} parent=151 // loop_footer
            %s316 = sadd.s32 1, %s312
          $region158: #{tpu_custom_call.1} parent=151 // loop_footer_branch
            %311 = sbr.rel target = $region154
          $region159: #{tpu_custom_call.1} parent=151 // loop_exit
            _
        $region152: #{tpu_custom_call.1} parent=23 // pred_fallthru
          _
        // Predicated region
        $region171: #{tpu_custom_call.1} parent=23 // pred_check
          _
        $region172: #{tpu_custom_call.1} parent=23 // pred_check_branch
          %344 = sbr.rel (0) target = $region174
        $region173: #{tpu_custom_call.1} parent=23 // pred_region
          %345 = vsyncadd %s301, 16
        $region174: #{tpu_custom_call.1} parent=23 // pred_fallthru
          _
        %s346 = sadd.s32 %s103, 5
        %s347 = sld [smem:[#allocation5 + %s346]]
        %s348 = scalar_lea.vmem %s1, %s347
        %s349 = scalar_lea.vmem [#allocation2], 5
        %s350 = scalar_lea.sflag [#allocation3], 5
        %p352 = scmp.lt.u32.totalorder 1, 8
        %p353 = pneg %p352
        // Predicated region
        $region175: #{tpu_custom_call.1} parent=23 // pred_check
          _
        $region176: #{tpu_custom_call.1} parent=23 // pred_check_branch
          %355 = sbr.rel (%p352) target = $region178
        $region177: #{tpu_custom_call.1} parent=23 // pred_region
          %s370 = sand.u32 1, 7
          %p371 = scmp.eq.s32.totalorder %s370, 0
          %p372 = pneg %p371
          // Predicated region
          $region190: #{tpu_custom_call.1} parent=177 // pred_check
            _
          $region191: #{tpu_custom_call.1} parent=177 // pred_check_branch
            %374 = sbr.rel (%p371) target = $region193
          $region192: #{tpu_custom_call.1} parent=177 // pred_region
            %s375 = sand.u32 1, 7
            %s376 = ssub.s32 1, %s375
            %s377 = scalar_lea.vmem %s348, %s376
            %s378 = ssub.s32 1, %s375
            %s379 = scalar_lea.vmem %s349, %s378 [#allocation2]
            %s380 = sshllo.u32 0, %s375
            loop: start=0, step=1, limit=1
            $region194: #{tpu_custom_call.1} parent=192 // loop_pre_header
              _
            $region195: #{tpu_custom_call.1} parent=192 // loop_header
              %s382 = sphi 0, %s386
              %p383 = scmp.ge.s32.totalorder %s382, 1
              %s387 = sphi %s377, %s377
              %s388 = sphi %s379, %s379
            $region196: #{tpu_custom_call.1} parent=192 // loop_header_branch
              %385 = sbr.rel (%p383) target = $region200
            $region197: #{tpu_custom_call.1} parent=192 // loop_body
              %v389 = vld [vmem:[%s387] sm:%s380]
              %390 = vst [vmem:[%s388] sm:%s380] %v389
            $region198: #{tpu_custom_call.1} parent=192 // loop_footer
              %s386 = sadd.s32 1, %s382
            $region199: #{tpu_custom_call.1} parent=192 // loop_footer_branch
              %381 = sbr.rel target = $region195
            $region200: #{tpu_custom_call.1} parent=192 // loop_exit
              _
          $region193: #{tpu_custom_call.1} parent=177 // pred_fallthru
            _
        $region178: #{tpu_custom_call.1} parent=23 // pred_fallthru
          _
        // Predicated region
        $region179: #{tpu_custom_call.1} parent=23 // pred_check
          %p356 = pneg %p352
        $region180: #{tpu_custom_call.1} parent=23 // pred_check_branch
          %358 = sbr.rel (%p356) target = $region182
        $region181: #{tpu_custom_call.1} parent=23 // pred_region
          %s359 = sshllo.u32 0, 1
          loop: start=0, step=1, limit=1
          $region183: #{tpu_custom_call.1} parent=181 // loop_pre_header
            _
          $region184: #{tpu_custom_call.1} parent=181 // loop_header
            %s361 = sphi 0, %s365
            %p362 = scmp.ge.s32.totalorder %s361, 1
            %s366 = sphi %s348, %s348
            %s367 = sphi %s349, %s349
          $region185: #{tpu_custom_call.1} parent=181 // loop_header_branch
            %364 = sbr.rel (%p362) target = $region189
          $region186: #{tpu_custom_call.1} parent=181 // loop_body
            %v368 = vld [vmem:[%s366] sm:%s359]
            %369 = vst [vmem:[%s367] sm:%s359] %v368
          $region187: #{tpu_custom_call.1} parent=181 // loop_footer
            %s365 = sadd.s32 1, %s361
          $region188: #{tpu_custom_call.1} parent=181 // loop_footer_branch
            %360 = sbr.rel target = $region184
          $region189: #{tpu_custom_call.1} parent=181 // loop_exit
            _
        $region182: #{tpu_custom_call.1} parent=23 // pred_fallthru
          _
        // Predicated region
        $region201: #{tpu_custom_call.1} parent=23 // pred_check
          _
        $region202: #{tpu_custom_call.1} parent=23 // pred_check_branch
          %393 = sbr.rel (0) target = $region204
        $region203: #{tpu_custom_call.1} parent=23 // pred_region
          %394 = vsyncadd %s350, 16
        $region204: #{tpu_custom_call.1} parent=23 // pred_fallthru
          _
        %s395 = sadd.s32 %s103, 6
        %s396 = sld [smem:[#allocation5 + %s395]]
        %s397 = scalar_lea.vmem %s1, %s396
        %s398 = scalar_lea.vmem [#allocation2], 6
        %s399 = scalar_lea.sflag [#allocation3], 6
        %p401 = scmp.lt.u32.totalorder 1, 8
        %p402 = pneg %p401
        // Predicated region
        $region205: #{tpu_custom_call.1} parent=23 // pred_check
          _
        $region206: #{tpu_custom_call.1} parent=23 // pred_check_branch
          %404 = sbr.rel (%p401) target = $region208
        $region207: #{tpu_custom_call.1} parent=23 // pred_region
          %s419 = sand.u32 1, 7
          %p420 = scmp.eq.s32.totalorder %s419, 0
          %p421 = pneg %p420
          // Predicated region
          $region220: #{tpu_custom_call.1} parent=207 // pred_check
            _
          $region221: #{tpu_custom_call.1} parent=207 // pred_check_branch
            %423 = sbr.rel (%p420) target = $region223
          $region222: #{tpu_custom_call.1} parent=207 // pred_region
            %s424 = sand.u32 1, 7
            %s425 = ssub.s32 1, %s424
            %s426 = scalar_lea.vmem %s397, %s425
            %s427 = ssub.s32 1, %s424
            %s428 = scalar_lea.vmem %s398, %s427 [#allocation2]
            %s429 = sshllo.u32 0, %s424
            loop: start=0, step=1, limit=1
            $region224: #{tpu_custom_call.1} parent=222 // loop_pre_header
              _
            $region225: #{tpu_custom_call.1} parent=222 // loop_header
              %s431 = sphi 0, %s435
              %p432 = scmp.ge.s32.totalorder %s431, 1
              %s436 = sphi %s426, %s426
              %s437 = sphi %s428, %s428
            $region226: #{tpu_custom_call.1} parent=222 // loop_header_branch
              %434 = sbr.rel (%p432) target = $region230
            $region227: #{tpu_custom_call.1} parent=222 // loop_body
              %v438 = vld [vmem:[%s436] sm:%s429]
              %439 = vst [vmem:[%s437] sm:%s429] %v438
            $region228: #{tpu_custom_call.1} parent=222 // loop_footer
              %s435 = sadd.s32 1, %s431
            $region229: #{tpu_custom_call.1} parent=222 // loop_footer_branch
              %430 = sbr.rel target = $region225
            $region230: #{tpu_custom_call.1} parent=222 // loop_exit
              _
          $region223: #{tpu_custom_call.1} parent=207 // pred_fallthru
            _
        $region208: #{tpu_custom_call.1} parent=23 // pred_fallthru
          _
        // Predicated region
        $region209: #{tpu_custom_call.1} parent=23 // pred_check
          %p405 = pneg %p401
        $region210: #{tpu_custom_call.1} parent=23 // pred_check_branch
          %407 = sbr.rel (%p405) target = $region212
        $region211: #{tpu_custom_call.1} parent=23 // pred_region
          %s408 = sshllo.u32 0, 1
          loop: start=0, step=1, limit=1
          $region213: #{tpu_custom_call.1} parent=211 // loop_pre_header
            _
          $region214: #{tpu_custom_call.1} parent=211 // loop_header
            %s410 = sphi 0, %s414
            %p411 = scmp.ge.s32.totalorder %s410, 1
            %s415 = sphi %s397, %s397
            %s416 = sphi %s398, %s398
          $region215: #{tpu_custom_call.1} parent=211 // loop_header_branch
            %413 = sbr.rel (%p411) target = $region219
          $region216: #{tpu_custom_call.1} parent=211 // loop_body
            %v417 = vld [vmem:[%s415] sm:%s408]
            %418 = vst [vmem:[%s416] sm:%s408] %v417
          $region217: #{tpu_custom_call.1} parent=211 // loop_footer
            %s414 = sadd.s32 1, %s410
          $region218: #{tpu_custom_call.1} parent=211 // loop_footer_branch
            %409 = sbr.rel target = $region214
          $region219: #{tpu_custom_call.1} parent=211 // loop_exit
            _
        $region212: #{tpu_custom_call.1} parent=23 // pred_fallthru
          _
        // Predicated region
        $region231: #{tpu_custom_call.1} parent=23 // pred_check
          _
        $region232: #{tpu_custom_call.1} parent=23 // pred_check_branch
          %442 = sbr.rel (0) target = $region234
        $region233: #{tpu_custom_call.1} parent=23 // pred_region
          %443 = vsyncadd %s399, 16
        $region234: #{tpu_custom_call.1} parent=23 // pred_fallthru
          _
        %s444 = sadd.s32 %s103, 7
        %s445 = sld [smem:[#allocation5 + %s444]]
        %s446 = scalar_lea.vmem %s1, %s445
        %s447 = scalar_lea.vmem [#allocation2], 7
        %s448 = scalar_lea.sflag [#allocation3], 7
        %p450 = scmp.lt.u32.totalorder 1, 8
        %p451 = pneg %p450
        // Predicated region
        $region235: #{tpu_custom_call.1} parent=23 // pred_check
          _
        $region236: #{tpu_custom_call.1} parent=23 // pred_check_branch
          %453 = sbr.rel (%p450) target = $region238
        $region237: #{tpu_custom_call.1} parent=23 // pred_region
          %s468 = sand.u32 1, 7
          %p469 = scmp.eq.s32.totalorder %s468, 0
          %p470 = pneg %p469
          // Predicated region
          $region250: #{tpu_custom_call.1} parent=237 // pred_check
            _
          $region251: #{tpu_custom_call.1} parent=237 // pred_check_branch
            %472 = sbr.rel (%p469) target = $region253
          $region252: #{tpu_custom_call.1} parent=237 // pred_region
            %s473 = sand.u32 1, 7
            %s474 = ssub.s32 1, %s473
            %s475 = scalar_lea.vmem %s446, %s474
            %s476 = ssub.s32 1, %s473
            %s477 = scalar_lea.vmem %s447, %s476 [#allocation2]
            %s478 = sshllo.u32 0, %s473
            loop: start=0, step=1, limit=1
            $region254: #{tpu_custom_call.1} parent=252 // loop_pre_header
              _
            $region255: #{tpu_custom_call.1} parent=252 // loop_header
              %s480 = sphi 0, %s484
              %p481 = scmp.ge.s32.totalorder %s480, 1
              %s485 = sphi %s475, %s475
              %s486 = sphi %s477, %s477
            $region256: #{tpu_custom_call.1} parent=252 // loop_header_branch
              %483 = sbr.rel (%p481) target = $region260
            $region257: #{tpu_custom_call.1} parent=252 // loop_body
              %v487 = vld [vmem:[%s485] sm:%s478]
              %488 = vst [vmem:[%s486] sm:%s478] %v487
            $region258: #{tpu_custom_call.1} parent=252 // loop_footer
              %s484 = sadd.s32 1, %s480
            $region259: #{tpu_custom_call.1} parent=252 // loop_footer_branch
              %479 = sbr.rel target = $region255
            $region260: #{tpu_custom_call.1} parent=252 // loop_exit
              _
          $region253: #{tpu_custom_call.1} parent=237 // pred_fallthru
            _
        $region238: #{tpu_custom_call.1} parent=23 // pred_fallthru
          _
        // Predicated region
        $region239: #{tpu_custom_call.1} parent=23 // pred_check
          %p454 = pneg %p450
        $region240: #{tpu_custom_call.1} parent=23 // pred_check_branch
          %456 = sbr.rel (%p454) target = $region242
        $region241: #{tpu_custom_call.1} parent=23 // pred_region
          %s457 = sshllo.u32 0, 1
          loop: start=0, step=1, limit=1
          $region243: #{tpu_custom_call.1} parent=241 // loop_pre_header
            _
          $region244: #{tpu_custom_call.1} parent=241 // loop_header
            %s459 = sphi 0, %s463
            %p460 = scmp.ge.s32.totalorder %s459, 1
            %s464 = sphi %s446, %s446
            %s465 = sphi %s447, %s447
          $region245: #{tpu_custom_call.1} parent=241 // loop_header_branch
            %462 = sbr.rel (%p460) target = $region249
          $region246: #{tpu_custom_call.1} parent=241 // loop_body
            %v466 = vld [vmem:[%s464] sm:%s457]
            %467 = vst [vmem:[%s465] sm:%s457] %v466
          $region247: #{tpu_custom_call.1} parent=241 // loop_footer
            %s463 = sadd.s32 1, %s459
          $region248: #{tpu_custom_call.1} parent=241 // loop_footer_branch
            %458 = sbr.rel target = $region244
          $region249: #{tpu_custom_call.1} parent=241 // loop_exit
            _
        $region242: #{tpu_custom_call.1} parent=23 // pred_fallthru
          _
        // Predicated region
        $region261: #{tpu_custom_call.1} parent=23 // pred_check
          _
        $region262: #{tpu_custom_call.1} parent=23 // pred_check_branch
          %491 = sbr.rel (0) target = $region264
        $region263: #{tpu_custom_call.1} parent=23 // pred_region
          %492 = vsyncadd %s448, 16
        $region264: #{tpu_custom_call.1} parent=23 // pred_fallthru
          _
        %s493 = smul.u32 1, 1
        %s494 = sshll.u32 %s493, 4
        %495 = dma.done [#allocation3], %s494
        %s496 = sshll.u32 %s493, 4
        %497 = dma.done %s154, %s496
        %s498 = sshll.u32 %s493, 4
        %499 = dma.done %s203, %s498
        %s500 = sshll.u32 %s493, 4
        %501 = dma.done %s252, %s500
        %s502 = sshll.u32 %s493, 4
        %503 = dma.done %s301, %s502
        %s504 = sshll.u32 %s493, 4
        %505 = dma.done %s350, %s504
        %s506 = sshll.u32 %s493, 4
        %507 = dma.done %s399, %s506
        %s508 = sshll.u32 %s493, 4
        %509 = dma.done %s448, %s508
        %v510 = vld [vmem:[#allocation2] sm:$0xff]
        %v511 = vld [vmem:[%s2] sm:$0xff]
        %v512 = vadd.f32 %v510, %v511
        %vm513 = vcmask 261120
        %514 = vst.msk [vmem:[%s102] sm:$0xff] %vm513, %v512
        %s515 = sand.u32 %s52, 1
        %s516 = scalar_lea.sflag [#allocation7], %s515
        %s517 = sand.u32 %s52, 1
        %s518 = smul.addr %s517, 8
        %s519 = scalar_lea.vmem [#allocation6], %s518
        // Predicated region
        $region265: #{tpu_custom_call.1} parent=23 // pred_check
          %p520 = pneg %p62
        $region266: #{tpu_custom_call.1} parent=23 // pred_check_branch
          %522 = sbr.rel (%p520) target = $region268
        $region267: #{tpu_custom_call.1} parent=23 // pred_region
          %s524 = ssub.s32 128, 128
          %525 = vsyncadd %s516, %s524
          %s526 = smul.addr %s23, 128
          %s527 = scalar_lea.hbm %s3, %s526
          %s529 = sshll.u32 %s519, 4
          %s530 = int_to_ptr.vmem [resolvable:$true] %s529
          %532 = dma.vmem_to_hbm [thread:$0]  %s530, 128, %s527, %s516
        $region268: #{tpu_custom_call.1} parent=23 // pred_fallthru
          _
      $region24: #{tpu_custom_call.1} parent=5 // pred_fallthru
        _
      %p533 = scmp.le.s32.totalorder 2, %s18
      // Predicated region
      $region269: #{tpu_custom_call.1} parent=5 // pred_check
        %p534 = pneg %p533
      $region270: #{tpu_custom_call.1} parent=5 // pred_check_branch
        %536 = sbr.rel (%p534) target = $region272
      $region271: #{tpu_custom_call.1} parent=5 // pred_region
        %s537 = ssub.s32 %s18, 2
        // Predicated region
        $region273: #{tpu_custom_call.1} parent=271 // pred_check
          %p538 = pneg %p68
        $region274: #{tpu_custom_call.1} parent=271 // pred_check_branch
          %540 = sbr.rel (%p538) target = $region276
        $region275: #{tpu_custom_call.1} parent=271 // pred_region
          %s541 = sand.u32 %s53, 1
          %s542 = scalar_lea.sflag [#allocation7], %s541
          %s543 = sand.u32 %s53, 1
          %s544 = smul.addr %s543, 8
          %s545 = scalar_lea.vmem [#allocation6], %s544
          %546 = dma.done %s542, 128
        $region276: #{tpu_custom_call.1} parent=271 // pred_fallthru
          _
      $region272: #{tpu_custom_call.1} parent=5 // pred_fallthru
        _
    $region6: #{tpu_custom_call.1} parent=1 // loop_footer
      %s22 = sadd.s32 1, %s18
    $region7: #{tpu_custom_call.1} parent=1 // loop_footer_branch
      %17 = sbr.rel target = $region3
    $region8: #{tpu_custom_call.1} parent=1 // loop_exit
      _
    %547 = vsyncpa [#allocation7], 1
    %s548 = scalar_lea.sflag [#allocation7], 1
    %549 = vsyncpa %s548, 1
  %550 = vsyncmov [#allocation3]
  %s551 = vpop.sfrf %550
  %p552 = scmp.eq.s32.totalorder %s551, 0
  %p553 = pneg %p552
  %555 = shalt.err (%p553)
  %s556 = scalar_lea.sflag [#allocation3], 1
  %557 = vsyncmov %s556
  %s558 = vpop.sfrf %557
  %p559 = scmp.eq.s32.totalorder %s558, 0
  %p560 = pneg %p559
  %562 = shalt.err (%p560)
  %s563 = scalar_lea.sflag [#allocation3], 2
  %564 = vsyncmov %s563
  %s565 = vpop.sfrf %564
  %p566 = scmp.eq.s32.totalorder %s565, 0
  %p567 = pneg %p566
  %569 = shalt.err (%p567)
  %s570 = scalar_lea.sflag [#allocation3], 3
  %571 = vsyncmov %s570
  %s572 = vpop.sfrf %571
  %p573 = scmp.eq.s32.totalorder %s572, 0
  %p574 = pneg %p573
  %576 = shalt.err (%p574)
  %s577 = scalar_lea.sflag [#allocation3], 4
  %578 = vsyncmov %s577
  %s579 = vpop.sfrf %578
  %p580 = scmp.eq.s32.totalorder %s579, 0
  %p581 = pneg %p580
  %583 = shalt.err (%p581)
  %s584 = scalar_lea.sflag [#allocation3], 5
  %585 = vsyncmov %s584
  %s586 = vpop.sfrf %585
  %p587 = scmp.eq.s32.totalorder %s586, 0
  %p588 = pneg %p587
  %590 = shalt.err (%p588)
  %s591 = scalar_lea.sflag [#allocation3], 6
  %592 = vsyncmov %s591
  %s593 = vpop.sfrf %592
  %p594 = scmp.eq.s32.totalorder %s593, 0
  %p595 = pneg %p594
  %597 = shalt.err (%p595)
  %s598 = scalar_lea.sflag [#allocation3], 7
  %599 = vsyncmov %s598
  %s600 = vpop.sfrf %599
  %p601 = scmp.eq.s32.totalorder %s600, 0
  %p602 = pneg %p601
  %604 = shalt.err (%p602)

</llo_original>
